<compile_context>
chip_gen: v7x
topology: tpu7x:2x2x1
jax: 0.10.0
libtpu: 0.0.40
codegen_flags: <defaults>
</compile_context>

<pallas_src>
import jax
import jax.numpy as jnp
from jax.experimental import pallas as pl
from jax.experimental.pallas import tpu as pltpu


def _round_up(x: int, m: int) -> int:
    return (x + m - 1) // m * m


def _ode_func_nn_kernel(y_ref, w1_ref, b1_ref, w2_ref, b2_ref, out_ref):
    y = y_ref[...]
    y3 = y * y * y                                            # VPU
    h = jnp.dot(y3, w1_ref[...],                              # MXU
                preferred_element_type=jnp.float32) + b1_ref[...]
    h = jnp.tanh(h)                                           # EUP
    out = jnp.dot(h, w2_ref[...],                             # MXU
                  preferred_element_type=jnp.float32) + b2_ref[...]
    out_ref[...] = out.astype(out_ref.dtype)


def ode_func_nn_forward(t, y, W1, b1, W2, b2):
    """Pallas implementation of OdeFuncNN.forward.

    t is accepted for API parity but (as in the PyTorch module) unused.
    W1: (hidden, in), b1: (hidden,), W2: (out, hidden), b2: (out,)
    (PyTorch nn.Linear layout).
    """
    del t
    B, Din = y.shape
    H, _ = W1.shape
    Dout, _ = W2.shape

    # --- parameter-only prep, hoisted out of the kernel -------------------
    W1t = W1.T  # (Din, H)
    W2t = W2.T  # (H, Dout)

    # Lane-dense padding: last dims -> multiples of 128, batch -> multiple of 8.
    Dp = _round_up(Din, 128)
    Hp = _round_up(H, 128)
    Op = _round_up(Dout, 128)
    TB = 256 if B > 256 else _round_up(B, 8)   # batch tile (sublane aligned)
    Bp = _round_up(B, TB)

    f32 = jnp.float32
    y_p = jnp.zeros((Bp, Dp), f32).at[:B, :Din].set(y.astype(f32))
    w1_p = jnp.zeros((Dp, Hp), f32).at[:Din, :H].set(W1t.astype(f32))
    b1_p = jnp.zeros((1, Hp), f32).at[0, :H].set(b1.astype(f32))
    w2_p = jnp.zeros((Hp, Op), f32).at[:H, :Dout].set(W2t.astype(f32))
    b2_p = jnp.zeros((1, Op), f32).at[0, :Dout].set(b2.astype(f32))

    grid = (Bp // TB,)

    cost = pl.CostEstimate(
        flops=2 * Bp * (Dp * Hp + Hp * Op),
        transcendentals=Bp * Hp,
        bytes_accessed=4 * (Bp * Dp + Dp * Hp + Hp + Hp * Op + Op + Bp * Op),
    )

    out_p = pl.pallas_call(
        _ode_func_nn_kernel,
        out_shape=jax.ShapeDtypeStruct((Bp, Op), f32),
        grid_spec=pltpu.PrefetchScalarGridSpec(
            num_scalar_prefetch=0,
            grid=grid,
            in_specs=[
                pl.BlockSpec((TB, Dp), lambda i: (i, 0)),   # y tile
                pl.BlockSpec((Dp, Hp), lambda i: (0, 0)),   # W1^T (resident)
                pl.BlockSpec((1, Hp), lambda i: (0, 0)),    # b1
                pl.BlockSpec((Hp, Op), lambda i: (0, 0)),   # W2^T (resident)
                pl.BlockSpec((1, Op), lambda i: (0, 0)),    # b2
            ],
            out_specs=pl.BlockSpec((TB, Op), lambda i: (i, 0)),
        ),
        compiler_params=pltpu.CompilerParams(
            dimension_semantics=("parallel",),   # shards batch tiles on v7x
        ),
        cost_estimate=cost,
    )(y_p, w1_p, b1_p, w2_p, b2_p)

    return out_p[:B, :Dout].astype(y.dtype)


def _reference_forward(y, W1, b1, W2, b2):
    h = jnp.tanh((y ** 3) @ W1.T + b1)
    return h @ W2.T + b2


if __name__ == "__main__":
    batch = 8
    input_dim = 32
    hidden_dim = 32
    output_dim = 32

    key = jax.random.PRNGKey(0)
    k_w1, k_w2, k_y = jax.random.split(key, 3)

    # Deterministic init matching the PyTorch __init__:
    # weights ~ N(0, 0.1), biases = 0.
    W1 = 0.1 * jax.random.normal(k_w1, (hidden_dim, input_dim), jnp.float32)
    b1 = jnp.zeros((hidden_dim,), jnp.float32)
    W2 = 0.1 * jax.random.normal(k_w2, (output_dim, hidden_dim), jnp.float32)
    b2 = jnp.zeros((output_dim,), jnp.float32)

    y = jax.random.normal(k_y, (batch, input_dim), jnp.float32)
    t = jnp.float32(0.0)

    dydt = ode_func_nn_forward(t, y, W1, b1, W2, b2)
    dydt = jax.block_until_ready(dydt)

    ref = _reference_forward(y, W1, b1, W2, b2)
    assert dydt.shape == (batch, output_dim)
    assert jnp.allclose(dydt, ref, atol=1e-3, rtol=1e-3), (
        float(jnp.max(jnp.abs(dydt - ref)))
    )

    print("KERNEL_OK")
</pallas_src>

<mosaic_0001>
module attributes {stable_mosaic.version = 11 : i64} {
  func.func @_ode_func_nn_kernel(%arg0: i32, %arg1: memref<8x128xf32, #tpu.memory_space<vmem>>, %arg2: memref<128x128xf32, #tpu.memory_space<vmem>>, %arg3: memref<1x128xf32, #tpu.memory_space<vmem>>, %arg4: memref<128x128xf32, #tpu.memory_space<vmem>>, %arg5: memref<1x128xf32, #tpu.memory_space<vmem>>, %arg6: memref<8x128xf32, #tpu.memory_space<vmem>>) attributes {dimension_semantics = [#tpu.dimension_semantics<parallel>], iteration_bounds = array<i64: 1>, scalar_prefetch = 0 : i64, scratch_operands = 0 : i64, tpu.core_type = #tpu.core_type<tc>, window_params = [{transform_indices = @transform_0, window_bounds = array<i64: 8, 128>}, {pipeline_mode = #tpu.pipeline_mode<synchronous>, transform_indices = @transform_1, window_bounds = array<i64: 128, 128>}, {pipeline_mode = #tpu.pipeline_mode<synchronous>, transform_indices = @transform_2, window_bounds = array<i64: 1, 128>}, {pipeline_mode = #tpu.pipeline_mode<synchronous>, transform_indices = @transform_3, window_bounds = array<i64: 128, 128>}, {pipeline_mode = #tpu.pipeline_mode<synchronous>, transform_indices = @transform_4, window_bounds = array<i64: 1, 128>}, {transform_indices = @transform_5, window_bounds = array<i64: 8, 128>}]} {
    %c0 = arith.constant 0 : index
    %c0_0 = arith.constant 0 : index
    %0 = vector.load %arg1[%c0, %c0_0] : memref<8x128xf32, #tpu.memory_space<vmem>>, vector<8x128xf32>
    %1 = arith.mulf %0, %0 : vector<8x128xf32>
    %2 = arith.mulf %1, %0 : vector<8x128xf32>
    %c0_1 = arith.constant 0 : index
    %c0_2 = arith.constant 0 : index
    %3 = vector.load %arg2[%c0_1, %c0_2] : memref<128x128xf32, #tpu.memory_space<vmem>>, vector<128x128xf32>
    %cst = arith.constant dense<0.000000e+00> : vector<8x128xf32>
    %4 = tpu.matmul %2, %3, %cst {dimension_numbers = #tpu.dot_dimension_numbers<[1], [0], [0], [1], [0, 0, 1, 1], [], []>} : vector<8x128xf32>, vector<128x128xf32>, vector<8x128xf32> -> vector<8x128xf32>
    %c0_3 = arith.constant 0 : index
    %c0_4 = arith.constant 0 : index
    %5 = vector.load %arg3[%c0_3, %c0_4] : memref<1x128xf32, #tpu.memory_space<vmem>>, vector<1x128xf32>
    %6 = vector.broadcast %5 : vector<1x128xf32> to vector<8x128xf32>
    %7 = arith.addf %4, %6 : vector<8x128xf32>
    %8 = math.tanh %7 : vector<8x128xf32>
    %c0_5 = arith.constant 0 : index
    %c0_6 = arith.constant 0 : index
    %9 = vector.load %arg4[%c0_5, %c0_6] : memref<128x128xf32, #tpu.memory_space<vmem>>, vector<128x128xf32>
    %cst_7 = arith.constant dense<0.000000e+00> : vector<8x128xf32>
    %10 = tpu.matmul %8, %9, %cst_7 {dimension_numbers = #tpu.dot_dimension_numbers<[1], [0], [0], [1], [0, 0, 1, 1], [], []>} : vector<8x128xf32>, vector<128x128xf32>, vector<8x128xf32> -> vector<8x128xf32>
    %c0_8 = arith.constant 0 : index
    %c0_9 = arith.constant 0 : index
    %11 = vector.load %arg5[%c0_8, %c0_9] : memref<1x128xf32, #tpu.memory_space<vmem>>, vector<1x128xf32>
    %12 = vector.broadcast %11 : vector<1x128xf32> to vector<8x128xf32>
    %13 = arith.addf %10, %12 : vector<8x128xf32>
    %c0_10 = arith.constant 0 : index
    %c0_11 = arith.constant 0 : index
    %14 = vector.load %arg6[%c0_10, %c0_11] : memref<8x128xf32, #tpu.memory_space<vmem>>, vector<8x128xf32>
    tpu.vector_store %arg6[%c0_10, %c0_11], %13 {strides = array<i32>} : memref<8x128xf32, #tpu.memory_space<vmem>>, vector<8x128xf32>,
    return
  }
  func.func @transform_0(%arg0: i32) -> (i32, i32) {
    %c0_i32 = arith.constant 0 : i32
    %c0_i32_0 = arith.constant 0 : i32
    return %arg0, %c0_i32 : i32, i32
  }
  func.func @transform_1(%arg0: i32) -> (i32, i32) {
    %c0_i32 = arith.constant 0 : i32
    %c0_i32_0 = arith.constant 0 : i32
    %c0_i32_1 = arith.constant 0 : i32
    return %c0_i32, %c0_i32_0 : i32, i32
  }
  func.func @transform_2(%arg0: i32) -> (i32, i32) {
    %c0_i32 = arith.constant 0 : i32
    %c0_i32_0 = arith.constant 0 : i32
    %c0_i32_1 = arith.constant 0 : i32
    return %c0_i32, %c0_i32_0 : i32, i32
  }
  func.func @transform_3(%arg0: i32) -> (i32, i32) {
    %c0_i32 = arith.constant 0 : i32
    %c0_i32_0 = arith.constant 0 : i32
    %c0_i32_1 = arith.constant 0 : i32
    return %c0_i32, %c0_i32_0 : i32, i32
  }
  func.func @transform_4(%arg0: i32) -> (i32, i32) {
    %c0_i32 = arith.constant 0 : i32
    %c0_i32_0 = arith.constant 0 : i32
    %c0_i32_1 = arith.constant 0 : i32
    return %c0_i32, %c0_i32_0 : i32, i32
  }
  func.func @transform_5(%arg0: i32) -> (i32, i32) {
    %c0_i32 = arith.constant 0 : i32
    %c0_i32_0 = arith.constant 0 : i32
    return %arg0, %c0_i32 : i32, i32
  }
}

</mosaic_0001>

<llo_original>
// kernel: tpu_custom_call.1
$region0: #{tpu_custom_call.1}
  #allocation0 [shape = 'u32[]', space=smem, size = 0x4, offset = 0x4, fixed_abs, tag = 'smem constant byte address 0x4 - core index']
  #allocation1 [shape = 'u32[144,128]{1,0:T(1,128)}', space=vmem, size = 0x12000, scoped, tag = 'internal scratch']
  %s0 = inlined_call_operand.hbm [shape: f32[8,128], index: 0, kind: input, shape index: {}]
  %s1 = inlined_call_operand.hbm [shape: f32[128,128], index: 1, kind: input, shape index: {}]
  %s2 = inlined_call_operand.vmem [shape: f32[1,128], index: 2, kind: input, shape index: {}]
  %s3 = inlined_call_operand.hbm [shape: f32[128,128], index: 3, kind: input, shape index: {}]
  %s4 = inlined_call_operand.vmem [shape: f32[1,128], index: 4, kind: input, shape index: {}]
  %s5 = inlined_call_operand.hbm [shape: f32[8,128], index: 5, kind: output, shape index: {}]
  %s6 = sld [smem:[#allocation0]]
  $region42: #{tpu_custom_call.1} parent=0
    _
  %s8 = ssub.s32 1, %s6
  %s9 = scalar_select 0, %s8, %s6
  $region1: #{tpu_custom_call.1} parent=0
    #allocation2 [shape = 'u8[4096]{0}', space=vmem, size = 0x1000, scoped, tag = 'input window, operand 0, single buffered']
    #allocation3 [shape = 's32[1]{0}', space=sflag, size = 0x4, scoped, tag = 'scoped memory for tpu_custom_call.1']
    #allocation4 [shape = 's32[1]{0}', space=sflag, size = 0x4, scoped, tag = 'scoped memory for tpu_custom_call.1']
    #allocation5 [shape = 'u8[65536]{0}', space=vmem, size = 0x10000, scoped, tag = 'input window, operand 1, single buffered']
    #allocation6 [shape = 's32[1]{0}', space=sflag, size = 0x4, scoped, tag = 'scoped memory for tpu_custom_call.1']
    #allocation7 [shape = 'u8[65536]{0}', space=vmem, size = 0x10000, scoped, tag = 'input window, operand 3, single buffered']
    #allocation8 [shape = 'u8[4096]{0}', space=vmem, size = 0x1000, scoped, tag = 'output window, operand 0, single buffered']
    %10 = vsyncpa [#allocation3], 0
    %11 = vsyncpa [#allocation6], 0
    %12 = vsyncpa [#allocation4], 0
    // Predicated region
    $region2: #{tpu_custom_call.1} parent=1 // pred_check
      _
    $region3: #{tpu_custom_call.1} parent=1 // pred_check_branch
      %14 = sbr.rel (0) target = $region5
    $region4: #{tpu_custom_call.1} parent=1 // pred_region
      %s16 = ssub.s32 128, 128
      %17 = vsyncadd [#allocation3], %s16
      %s19 = sshll.u32 [#allocation2], 4
      %s20 = int_to_ptr.vmem [resolvable:$true] %s19
      %22 = dma.hbm_to_vmem [thread:$0]  %s0, 128, %s20, [#allocation3]
    $region5: #{tpu_custom_call.1} parent=1 // pred_fallthru
      _
    // Predicated region
    $region6: #{tpu_custom_call.1} parent=1 // pred_check
      _
    $region7: #{tpu_custom_call.1} parent=1 // pred_check_branch
      %24 = sbr.rel (0) target = $region9
    $region8: #{tpu_custom_call.1} parent=1 // pred_region
      %s26 = ssub.s32 2048, 2048
      %27 = vsyncadd [#allocation6], %s26
      %s28 = sshll.u32 [#allocation5], 4
      %s29 = int_to_ptr.vmem [resolvable:$true] %s28
      %34 = dma.hbm_to_vmem [thread:$0]  %s1, 2048, %s29, [#allocation6], 128, 128, 8
    $region9: #{tpu_custom_call.1} parent=1 // pred_fallthru
      _
    // Predicated region
    $region10: #{tpu_custom_call.1} parent=1 // pred_check
      _
    $region11: #{tpu_custom_call.1} parent=1 // pred_check_branch
      %36 = sbr.rel (0) target = $region13
    $region12: #{tpu_custom_call.1} parent=1 // pred_region
      _
    $region13: #{tpu_custom_call.1} parent=1 // pred_fallthru
      _
    // Predicated region
    $region14: #{tpu_custom_call.1} parent=1 // pred_check
      _
    $region15: #{tpu_custom_call.1} parent=1 // pred_check_branch
      %38 = sbr.rel (0) target = $region17
    $region16: #{tpu_custom_call.1} parent=1 // pred_region
      %s40 = ssub.s32 2048, 2048
      %41 = vsyncadd [#allocation6], %s40
      %s42 = sshll.u32 [#allocation7], 4
      %s43 = int_to_ptr.vmem [resolvable:$true] %s42
      %48 = dma.hbm_to_vmem [thread:$0]  %s3, 2048, %s43, [#allocation6], 128, 128, 8
    $region17: #{tpu_custom_call.1} parent=1 // pred_fallthru
      _
    // Predicated region
    $region18: #{tpu_custom_call.1} parent=1 // pred_check
      _
    $region19: #{tpu_custom_call.1} parent=1 // pred_check_branch
      %50 = sbr.rel (0) target = $region21
    $region20: #{tpu_custom_call.1} parent=1 // pred_region
      _
    $region21: #{tpu_custom_call.1} parent=1 // pred_fallthru
      _
    // Predicated region
    $region22: #{tpu_custom_call.1} parent=1 // pred_check
      _
    $region23: #{tpu_custom_call.1} parent=1 // pred_check_branch
      %52 = sbr.rel (0) target = $region25
    $region24: #{tpu_custom_call.1} parent=1 // pred_region
      %53 = dma.done [#allocation3], 128
    $region25: #{tpu_custom_call.1} parent=1 // pred_fallthru
      _
    // Predicated region
    $region26: #{tpu_custom_call.1} parent=1 // pred_check
      _
    $region27: #{tpu_custom_call.1} parent=1 // pred_check_branch
      %55 = sbr.rel (0) target = $region29
    $region28: #{tpu_custom_call.1} parent=1 // pred_region
      %56 = dma.done [#allocation6], 2048
    $region29: #{tpu_custom_call.1} parent=1 // pred_fallthru
      _
    // Predicated region
    $region30: #{tpu_custom_call.1} parent=1 // pred_check
      _
    $region31: #{tpu_custom_call.1} parent=1 // pred_check_branch
      %58 = sbr.rel (0) target = $region33
    $region32: #{tpu_custom_call.1} parent=1 // pred_region
      %59 = dma.done [#allocation6], 2048
    $region33: #{tpu_custom_call.1} parent=1 // pred_fallthru
      _
    %v60 = vld [vmem:[#allocation2] sm:$0xff]
    %v61 = vmul.f32 %v60, %v60
    %v62 = vmul.f32 %v61, %v60
    %v63 = vld [vmem:[#allocation5] sm:$0xff]
    %v64 = vld [vmem:[#allocation5 + $0x8] sm:$0xff]
    %v65 = vld [vmem:[#allocation5 + $0x10] sm:$0xff]
    %v66 = vld [vmem:[#allocation5 + $0x18] sm:$0xff]
    %v67 = vld [vmem:[#allocation5 + $0x20] sm:$0xff]
    %v68 = vld [vmem:[#allocation5 + $0x28] sm:$0xff]
    %v69 = vld [vmem:[#allocation5 + $0x30] sm:$0xff]
    %v70 = vld [vmem:[#allocation5 + $0x38] sm:$0xff]
    %v71 = vld [vmem:[#allocation5 + $0x40] sm:$0xff]
    %v72 = vld [vmem:[#allocation5 + $0x48] sm:$0xff]
    %v73 = vld [vmem:[#allocation5 + $0x50] sm:$0xff]
    %v74 = vld [vmem:[#allocation5 + $0x58] sm:$0xff]
    %v75 = vld [vmem:[#allocation5 + $0x60] sm:$0xff]
    %v76 = vld [vmem:[#allocation5 + $0x68] sm:$0xff]
    %v77 = vld [vmem:[#allocation5 + $0x70] sm:$0xff]
    %v78 = vld [vmem:[#allocation5 + $0x78] sm:$0xff]
    %v79 = vld [vmem:[%s2] sm:$0x1]
    %v81 = vlaneseq
    %v82 = vshrl.u32 %v81, 7
    %v83 = vsub.s32 0, %v82
    %v84 = vrot.slane %v79, %v83
    %86 = vmatprep.subr.mxu0 0.0
    %87 = vmatpush1.msra.mxu0 %v63
    %88 = vmatprep.subr.mxu0 0.0
    %89 = vmatpush1.msra.mxu0 %v64
    %90 = vmatprep.subr.mxu0 0.0
    %91 = vmatpush1.msra.mxu0 %v65
    %92 = vmatprep.subr.mxu0 0.0
    %93 = vmatpush1.msra.mxu0 %v66
    %94 = vmatprep.subr.mxu0 0.0
    %95 = vmatpush1.msra.mxu0 %v67
    %96 = vmatprep.subr.mxu0 0.0
    %97 = vmatpush1.msra.mxu0 %v68
    %98 = vmatprep.subr.mxu0 0.0
    %99 = vmatpush1.msra.mxu0 %v69
    %100 = vmatprep.subr.mxu0 0.0
    %101 = vmatpush1.msra.mxu0 %v70
    %102 = vmatprep.subr.mxu0 0.0
    %103 = vmatpush1.msra.mxu0 %v71
    %104 = vmatprep.subr.mxu0 0.0
    %105 = vmatpush1.msra.mxu0 %v72
    %106 = vmatprep.subr.mxu0 0.0
    %107 = vmatpush1.msra.mxu0 %v73
    %108 = vmatprep.subr.mxu0 0.0
    %109 = vmatpush1.msra.mxu0 %v74
    %110 = vmatprep.subr.mxu0 0.0
    %111 = vmatpush1.msra.mxu0 %v75
    %112 = vmatprep.subr.mxu0 0.0
    %113 = vmatpush1.msra.mxu0 %v76
    %114 = vmatprep.subr.mxu0 0.0
    %115 = vmatpush1.msra.mxu0 %v77
    %116 = vmatprep.subr.mxu0 0.0
    %117 = vmatpush1.msra.mxu0 %v78
    %118 = vmatprep.subr.mxu0 0.0
    %119 = vmatpush1.msra.mxu0 0.0
    %120 = vmatprep.subr.mxu0 0.0
    %121 = vmatpush1.msra.mxu0 0.0
    %122 = vmatprep.subr.mxu0 0.0
    %123 = vmatpush1.msra.mxu0 0.0
    %124 = vmatprep.subr.mxu0 0.0
    %125 = vmatpush1.msra.mxu0 0.0
    %126 = vmatprep.subr.mxu0 0.0
    %127 = vmatpush1.msra.mxu0 0.0
    %128 = vmatprep.subr.mxu0 0.0
    %129 = vmatpush1.msra.mxu0 0.0
    %130 = vmatprep.subr.mxu0 0.0
    %131 = vmatpush1.msra.mxu0 0.0
    %132 = vmatprep.subr.mxu0 0.0
    %133 = vmatpush1.msra.mxu0 0.0
    %134 = vmatprep.subr.mxu0 0.0
    %135 = vmatpush1.msra.mxu0 0.0
    %136 = vmatprep.subr.mxu0 0.0
    %137 = vmatpush1.msra.mxu0 0.0
    %138 = vmatprep.subr.mxu0 0.0
    %139 = vmatpush1.msra.mxu0 0.0
    %140 = vmatprep.subr.mxu0 0.0
    %141 = vmatpush1.msra.mxu0 0.0
    %142 = vmatprep.subr.mxu0 0.0
    %143 = vmatpush1.msra.mxu0 0.0
    %144 = vmatprep.subr.mxu0 0.0
    %145 = vmatpush1.msra.mxu0 0.0
    %146 = vmatprep.subr.mxu0 0.0
    %147 = vmatpush1.msra.mxu0 0.0
    %148 = vmatprep.subr.mxu0 0.0
    %149 = vmatpush1.msra.mxu0 0.0
    %150 = vmatprep.mubr.f32.mxu0 0.0
    %151 = vmatmul.mubr.f32.gmra.mrb[0].mxu0 %v62
    %v152 = vpop.f32.mrb[0].mxu0
    %v153 = vadd.f32 %v84, %v152
    %v154 = vpop.f32.mrb[0].mxu0
    %155 = vdwg.mxu0
    %v156 = vtanh.pop %v153
    %v157 = vld [vmem:[#allocation7] sm:$0xff]
    %v158 = vld [vmem:[#allocation7 + $0x8] sm:$0xff]
    %v159 = vld [vmem:[#allocation7 + $0x10] sm:$0xff]
    %v160 = vld [vmem:[#allocation7 + $0x18] sm:$0xff]
    %v161 = vld [vmem:[#allocation7 + $0x20] sm:$0xff]
    %v162 = vld [vmem:[#allocation7 + $0x28] sm:$0xff]
    %v163 = vld [vmem:[#allocation7 + $0x30] sm:$0xff]
    %v164 = vld [vmem:[#allocation7 + $0x38] sm:$0xff]
    %v165 = vld [vmem:[#allocation7 + $0x40] sm:$0xff]
    %v166 = vld [vmem:[#allocation7 + $0x48] sm:$0xff]
    %v167 = vld [vmem:[#allocation7 + $0x50] sm:$0xff]
    %v168 = vld [vmem:[#allocation7 + $0x58] sm:$0xff]
    %v169 = vld [vmem:[#allocation7 + $0x60] sm:$0xff]
    %v170 = vld [vmem:[#allocation7 + $0x68] sm:$0xff]
    %v171 = vld [vmem:[#allocation7 + $0x70] sm:$0xff]
    %v172 = vld [vmem:[#allocation7 + $0x78] sm:$0xff]
    %v173 = vld [vmem:[%s4] sm:$0x1]
    %v175 = vlaneseq
    %v176 = vshrl.u32 %v175, 7
    %v177 = vsub.s32 0, %v176
    %v178 = vrot.slane %v173, %v177
    %180 = vmatprep.subr.mxu0 0.0
    %181 = vmatpush1.msra.mxu0 %v157
    %182 = vmatprep.subr.mxu0 0.0
    %183 = vmatpush1.msra.mxu0 %v158
    %184 = vmatprep.subr.mxu0 0.0
    %185 = vmatpush1.msra.mxu0 %v159
    %186 = vmatprep.subr.mxu0 0.0
    %187 = vmatpush1.msra.mxu0 %v160
    %188 = vmatprep.subr.mxu0 0.0
    %189 = vmatpush1.msra.mxu0 %v161
    %190 = vmatprep.subr.mxu0 0.0
    %191 = vmatpush1.msra.mxu0 %v162
    %192 = vmatprep.subr.mxu0 0.0
    %193 = vmatpush1.msra.mxu0 %v163
    %194 = vmatprep.subr.mxu0 0.0
    %195 = vmatpush1.msra.mxu0 %v164
    %196 = vmatprep.subr.mxu0 0.0
    %197 = vmatpush1.msra.mxu0 %v165
    %198 = vmatprep.subr.mxu0 0.0
    %199 = vmatpush1.msra.mxu0 %v166
    %200 = vmatprep.subr.mxu0 0.0
    %201 = vmatpush1.msra.mxu0 %v167
    %202 = vmatprep.subr.mxu0 0.0
    %203 = vmatpush1.msra.mxu0 %v168
    %204 = vmatprep.subr.mxu0 0.0
    %205 = vmatpush1.msra.mxu0 %v169
    %206 = vmatprep.subr.mxu0 0.0
    %207 = vmatpush1.msra.mxu0 %v170
    %208 = vmatprep.subr.mxu0 0.0
    %209 = vmatpush1.msra.mxu0 %v171
    %210 = vmatprep.subr.mxu0 0.0
    %211 = vmatpush1.msra.mxu0 %v172
    %212 = vmatprep.subr.mxu0 0.0
    %213 = vmatpush1.msra.mxu0 0.0
    %214 = vmatprep.subr.mxu0 0.0
    %215 = vmatpush1.msra.mxu0 0.0
    %216 = vmatprep.subr.mxu0 0.0
    %217 = vmatpush1.msra.mxu0 0.0
    %218 = vmatprep.subr.mxu0 0.0
    %219 = vmatpush1.msra.mxu0 0.0
    %220 = vmatprep.subr.mxu0 0.0
    %221 = vmatpush1.msra.mxu0 0.0
    %222 = vmatprep.subr.mxu0 0.0
    %223 = vmatpush1.msra.mxu0 0.0
    %224 = vmatprep.subr.mxu0 0.0
    %225 = vmatpush1.msra.mxu0 0.0
    %226 = vmatprep.subr.mxu0 0.0
    %227 = vmatpush1.msra.mxu0 0.0
    %228 = vmatprep.subr.mxu0 0.0
    %229 = vmatpush1.msra.mxu0 0.0
    %230 = vmatprep.subr.mxu0 0.0
    %231 = vmatpush1.msra.mxu0 0.0
    %232 = vmatprep.subr.mxu0 0.0
    %233 = vmatpush1.msra.mxu0 0.0
    %234 = vmatprep.subr.mxu0 0.0
    %235 = vmatpush1.msra.mxu0 0.0
    %236 = vmatprep.subr.mxu0 0.0
    %237 = vmatpush1.msra.mxu0 0.0
    %238 = vmatprep.subr.mxu0 0.0
    %239 = vmatpush1.msra.mxu0 0.0
    %240 = vmatprep.subr.mxu0 0.0
    %241 = vmatpush1.msra.mxu0 0.0
    %242 = vmatprep.subr.mxu0 0.0
    %243 = vmatpush1.msra.mxu0 0.0
    %244 = vmatprep.mubr.f32.mxu0 0.0
    %245 = vmatmul.mubr.f32.gmra.mrb[0].mxu0 %v156
    %v246 = vpop.f32.mrb[0].mxu0
    %v247 = vadd.f32 %v178, %v246
    %v248 = vpop.f32.mrb[0].mxu0
    %249 = vdwg.mxu0
    %250 = vst [vmem:[#allocation8] sm:$0xff] %v247
    // Predicated region
    $region34: #{tpu_custom_call.1} parent=1 // pred_check
      _
    $region35: #{tpu_custom_call.1} parent=1 // pred_check_branch
      %252 = sbr.rel (0) target = $region37
    $region36: #{tpu_custom_call.1} parent=1 // pred_region
      %s254 = ssub.s32 128, 128
      %255 = vsyncadd [#allocation4], %s254
      %s257 = sshll.u32 [#allocation8], 4
      %s258 = int_to_ptr.vmem [resolvable:$true] %s257
      %260 = dma.vmem_to_hbm [thread:$0]  %s258, 128, %s5, [#allocation4]
    $region37: #{tpu_custom_call.1} parent=1 // pred_fallthru
      _
    // Predicated region
    $region38: #{tpu_custom_call.1} parent=1 // pred_check
      _
    $region39: #{tpu_custom_call.1} parent=1 // pred_check_branch
      %262 = sbr.rel (0) target = $region41
    $region40: #{tpu_custom_call.1} parent=1 // pred_region
      %263 = dma.done [#allocation4], 128
    $region41: #{tpu_custom_call.1} parent=1 // pred_fallthru
      _
    %264 = vsyncpa [#allocation3], 1
    %265 = vsyncpa [#allocation6], 1
    %266 = vsyncpa [#allocation4], 1

</llo_original>
